<compile_context>
chip_gen: v5e
topology: v5e:2x2
jax: 0.10.0
libtpu: 0.0.40
codegen_flags: <defaults>
</compile_context>

<pallas_src>
import jax
import jax.numpy as jnp
from jax.experimental import pallas as pl
from jax.experimental.pallas import tpu as pltpu


def _round_up(x: int, m: int) -> int:
    return ((x + m - 1) // m) * m


def _joint_regressor_kernel(x_ref, w_ref, o_ref):
    # x_ref: (TB, K) contiguous batch-rows tile of flattened vertices,
    # w_ref: (K, Np) resident block-diagonal expanded weights,
    # o_ref: (TB, Np) lane-dense output tile.  One MXU matmul, f32 accumulate.
    o_ref[...] = jnp.dot(
        x_ref[...], w_ref[...], preferred_element_type=jnp.float32
    ).astype(o_ref.dtype)


def joint_regressor(
    vertices: jax.Array,
    regressor: jax.Array,
    *,
    tb_max: int = 1024,
    stream_bf16: bool = False,
    vmem_limit_bytes: int = 48 * 1024 * 1024,
) -> jax.Array:
    """Pallas equivalent of einsum('bvc,jv->bjc', vertices, regressor)."""
    B, V, C = vertices.shape
    J, V2 = regressor.shape
    assert V == V2, f"vertex-count mismatch: {V} vs {V2}"

    K = V * C
    JC = J * C
    Np = _round_up(max(JC, 1), 128)          # lane-dense output width

    x_dtype = jnp.bfloat16 if stream_bf16 else vertices.dtype
    o_dtype = vertices.dtype
    x_item = jnp.dtype(x_dtype).itemsize
    o_item = jnp.dtype(o_dtype).itemsize

    # Zero-copy, row-contiguous view of the vertex data (no transpose, no pad).
    x = vertices.reshape(B, K).astype(x_dtype)

    # Block-diagonal weight expansion (weights only -- tiny vs. vertex data;
    # in the real module this is a one-time precompute of the loaded buffer).
    eye = jnp.eye(C, dtype=regressor.dtype)
    w_exp = jnp.einsum("jv,cd->vcjd", regressor, eye).reshape(K, JC)
    w_exp = jnp.pad(w_exp, ((0, 0), (0, Np - JC))).astype(x_dtype)

    # Batch tile TB derived from the VMEM budget: weights conservatively
    # counted double-buffered (grid-invariant index_map -> fetched once; could
    # additionally be pipeline_mode=pl.Buffered(1)), X/O tiles double-buffered
    # by the pipeline.  Leave ~20% headroom under the scoped-VMEM limit.
    budget = int(0.8 * vmem_limit_bytes)
    w_bytes = 2 * K * Np * x_item
    row_bytes = 2 * (K * x_item + Np * o_item)
    tb = max((budget - w_bytes) // row_bytes, 8)
    # TODO(synk): if the expanded weights alone ever exceed the budget
    # (huge V*C*Np), add a K-tiled accumulator; not needed for body-model sizes.
    tb = min(int(tb), tb_max)
    if B <= 8:
        tb = B                                # single block; dim == full array dim
    else:
        tb = max(8, (tb // 8) * 8)            # sublane-aligned
        # keep >= 2 grid tiles so v7x megacore has work for both TensorCores
        tb = max(8, min(tb, _round_up(pl.cdiv(B, 2), 8)))

    grid = (pl.cdiv(B, tb),)                  # ragged last block allowed; no padding of B

    cost = pl.CostEstimate(
        flops=2 * B * K * Np,
        transcendentals=0,
        bytes_accessed=B * K * x_item + K * Np * x_item + B * Np * o_item,
    )

    out = pl.pallas_call(
        _joint_regressor_kernel,
        out_shape=jax.ShapeDtypeStruct((B, Np), o_dtype),
        grid_spec=pltpu.PrefetchScalarGridSpec(
            num_scalar_prefetch=0,
            grid=grid,
            in_specs=[
                # Fully-contiguous (tb, K) slab of flattened vertex rows per step.
                pl.BlockSpec((tb, K), lambda b: (b, 0)),
                # Expanded weights: grid-invariant -> DMA'd once, resident.
                pl.BlockSpec((K, Np), lambda b: (0, 0)),
            ],
            out_specs=pl.BlockSpec((tb, Np), lambda b: (b, 0)),
        ),
        compiler_params=pltpu.CompilerParams(
            # Independent batch tiles -> v7x megacore shards them across 2 TCs;
            # no-op on single-TC v5e/v6e.  Explicit VMEM limit covers v5e's
            # 16 MiB scoped default and stays under v7x's 64 MiB/TC physical.
            dimension_semantics=("parallel",),
            vmem_limit_bytes=vmem_limit_bytes,
        ),
        cost_estimate=cost,
    )(x, w_exp)

    # Tiny epilogue: drop lane padding, restore [B, J, C].  No transpose.
    return out[:, :JC].reshape(B, J, C)


def make_regressor_weights(key, num_joints: int, num_vertices: int) -> jax.Array:
    """Deterministic synthetic joint-regressor weights (rows sum to 1,
    mimicking a sparse convex vertex-combination regressor)."""
    # TODO(synk): real module loads weights from .npz/.pkl; synthesized here.
    logits = jax.random.normal(key, (num_joints, num_vertices), dtype=jnp.float32)
    return jax.nn.softmax(logits, axis=-1)


if __name__ == "__main__":
    B, V, C, J = 2, 432, 3, 24

    key = jax.random.PRNGKey(0)
    k_verts, k_w = jax.random.split(key)

    vertices = jax.random.normal(k_verts, (B, V, C), dtype=jnp.float32)
    weights = make_regressor_weights(k_w, J, V)

    joints = jax.block_until_ready(joint_regressor(vertices, weights))
    ref = jnp.einsum("bvc,jv->bjc", vertices, weights)
    assert joints.shape == (B, J, C)
    assert jnp.allclose(joints, ref, atol=2e-3, rtol=1e-2)

    # Multi-tile grid with a ragged last batch block (B=20, tb=8 -> 3 tiles).
    B2 = 20
    v2 = jax.random.normal(jax.random.PRNGKey(1), (B2, V, C), dtype=jnp.float32)
    j2 = jax.block_until_ready(joint_regressor(v2, weights, tb_max=8))
    r2 = jnp.einsum("bvc,jv->bjc", v2, weights)
    assert j2.shape == (B2, J, C)
    assert jnp.allclose(j2, r2, atol=2e-3, rtol=1e-2)

    # Optional bf16-streaming path (halves HBM traffic); loose tolerance.
    j3 = jax.block_until_ready(joint_regressor(v2, weights, stream_bf16=True))
    assert jnp.allclose(j3, r2, atol=3e-2, rtol=3e-2)

    print("KERNEL_OK")
</pallas_src>

<mosaic_0001>
module attributes {stable_mosaic.version = 11 : i64} {
  func.func @_joint_regressor_kernel(%arg0: i32, %arg1: memref<2x1296xf32, #tpu.memory_space<vmem>>, %arg2: memref<1296x128xf32, #tpu.memory_space<vmem>>, %arg3: memref<2x128xf32, #tpu.memory_space<vmem>>) attributes {dimension_semantics = [#tpu.dimension_semantics<parallel>], iteration_bounds = array<i64: 1>, scalar_prefetch = 0 : i64, scratch_operands = 0 : i64, tpu.core_type = #tpu.core_type<tc>, window_params = [{transform_indices = @transform_0, window_bounds = array<i64: 2, 1296>}, {pipeline_mode = #tpu.pipeline_mode<synchronous>, transform_indices = @transform_1, window_bounds = array<i64: 1296, 128>}, {transform_indices = @transform_2, window_bounds = array<i64: 2, 128>}]} {
    %c0 = arith.constant 0 : index
    %c0_0 = arith.constant 0 : index
    %0 = vector.load %arg1[%c0, %c0_0] : memref<2x1296xf32, #tpu.memory_space<vmem>>, vector<2x1296xf32>
    %c0_1 = arith.constant 0 : index
    %c0_2 = arith.constant 0 : index
    %1 = vector.load %arg2[%c0_1, %c0_2] : memref<1296x128xf32, #tpu.memory_space<vmem>>, vector<1296x128xf32>
    %cst = arith.constant dense<0.000000e+00> : vector<2x128xf32>
    %2 = tpu.matmul %0, %1, %cst {dimension_numbers = #tpu.dot_dimension_numbers<[1], [0], [0], [1], [0, 0, 1, 1], [], []>} : vector<2x1296xf32>, vector<1296x128xf32>, vector<2x128xf32> -> vector<2x128xf32>
    %c0_3 = arith.constant 0 : index
    %c0_4 = arith.constant 0 : index
    %3 = vector.load %arg3[%c0_3, %c0_4] : memref<2x128xf32, #tpu.memory_space<vmem>>, vector<2x128xf32>
    tpu.vector_store %arg3[%c0_3, %c0_4], %2 {strides = array<i32>} : memref<2x128xf32, #tpu.memory_space<vmem>>, vector<2x128xf32>,
    return
  }
  func.func @transform_0(%arg0: i32) -> (i32, i32) {
    %c0_i32 = arith.constant 0 : i32
    %c0_i32_0 = arith.constant 0 : i32
    return %arg0, %c0_i32 : i32, i32
  }
  func.func @transform_1(%arg0: i32) -> (i32, i32) {
    %c0_i32 = arith.constant 0 : i32
    %c0_i32_0 = arith.constant 0 : i32
    %c0_i32_1 = arith.constant 0 : i32
    return %c0_i32, %c0_i32_0 : i32, i32
  }
  func.func @transform_2(%arg0: i32) -> (i32, i32) {
    %c0_i32 = arith.constant 0 : i32
    %c0_i32_0 = arith.constant 0 : i32
    return %arg0, %c0_i32 : i32, i32
  }
}

</mosaic_0001>

<llo_original>
// kernel: tpu_custom_call.1
$region0: #{tpu_custom_call.1}
  #allocation0 [shape = 'u32[]', space=smem, size = 0x4, offset = 0x4, fixed_abs, tag = 'smem constant byte address 0x4 - core index']
  #allocation1 [shape = 'u32[72,128]{1,0:T(1,128)}', space=vmem, size = 0x9000, scoped, tag = 'internal scratch']
  %s0 = inlined_call_operand.hbm [shape: f32[2,1296], index: 0, kind: input, shape index: {}]
  %s1 = inlined_call_operand.hbm [shape: f32[1296,128], index: 1, kind: input, shape index: {}]
  %s2 = inlined_call_operand.hbm [shape: f32[2,128], index: 2, kind: output, shape index: {}]
  %s3 = sld [smem:[#allocation0]]
  $region26: #{tpu_custom_call.1} parent=0
    _
  %s5 = ssub.s32 1, %s3
  %s6 = scalar_select 0, %s5, %s3
  $region1: #{tpu_custom_call.1} parent=0
    #allocation2 [shape = 'u8[11264]{0}', space=vmem, size = 0x2c00, scoped, tag = 'input window, operand 0, single buffered']
    #allocation3 [shape = 's32[1]{0}', space=sflag, size = 0x4, scoped, tag = 'scoped memory for tpu_custom_call.1']
    #allocation4 [shape = 's32[1]{0}', space=sflag, size = 0x4, scoped, tag = 'scoped memory for tpu_custom_call.1']
    #allocation5 [shape = 'u8[663552]{0}', space=vmem, size = 0xa2000, scoped, tag = 'input window, operand 1, single buffered']
    #allocation6 [shape = 's32[1]{0}', space=sflag, size = 0x4, scoped, tag = 'scoped memory for tpu_custom_call.1']
    #allocation7 [shape = 'u8[1024]{0}', space=vmem, size = 0x400, scoped, tag = 'output window, operand 0, single buffered']
    %7 = vsyncpa [#allocation3], 0
    %8 = vsyncpa [#allocation6], 0
    %9 = vsyncpa [#allocation4], 0
    // Predicated region
    $region2: #{tpu_custom_call.1} parent=1 // pred_check
      _
    $region3: #{tpu_custom_call.1} parent=1 // pred_check_branch
      %11 = sbr.rel (0) target = $region5
    $region4: #{tpu_custom_call.1} parent=1 // pred_region
      %13 = vsyncadd [#allocation3], 0
      %s15 = sshll.u32 %s0, 4
      %s16 = int_to_ptr.hbm [resolvable:$true] %s15
      %s17 = sshll.u32 [#allocation2], 4
      %s18 = int_to_ptr.vmem [resolvable:$true] %s17
      %20 = dma.hbm_to_vmem [thread:$0]  %s16, 352, %s18, [#allocation3]
    $region5: #{tpu_custom_call.1} parent=1 // pred_fallthru
      _
    // Predicated region
    $region6: #{tpu_custom_call.1} parent=1 // pred_check
      _
    $region7: #{tpu_custom_call.1} parent=1 // pred_check_branch
      %22 = sbr.rel (0) target = $region9
    $region8: #{tpu_custom_call.1} parent=1 // pred_region
      %24 = vsyncadd [#allocation6], 0
      %s25 = sshll.u32 %s1, 4
      %s26 = int_to_ptr.hbm [resolvable:$true] %s25
      %s27 = sshll.u32 [#allocation5], 4
      %s28 = int_to_ptr.vmem [resolvable:$true] %s27
      %33 = dma.hbm_to_vmem [thread:$0]  %s26, 20736, %s28, [#allocation6], 128, 128, 8
    $region9: #{tpu_custom_call.1} parent=1 // pred_fallthru
      _
    // Predicated region
    $region10: #{tpu_custom_call.1} parent=1 // pred_check
      _
    $region11: #{tpu_custom_call.1} parent=1 // pred_check_branch
      %35 = sbr.rel (0) target = $region13
    $region12: #{tpu_custom_call.1} parent=1 // pred_region
      %37 = dma.done [#allocation3], 352
    $region13: #{tpu_custom_call.1} parent=1 // pred_fallthru
      _
    // Predicated region
    $region14: #{tpu_custom_call.1} parent=1 // pred_check
      _
    $region15: #{tpu_custom_call.1} parent=1 // pred_check_branch
      %39 = sbr.rel (0) target = $region17
    $region16: #{tpu_custom_call.1} parent=1 // pred_region
      %41 = dma.done [#allocation6], 20736
    $region17: #{tpu_custom_call.1} parent=1 // pred_fallthru
      _
    %v42 = vld [vmem:[#allocation2] sm:$0xff]
    %v43 = vld [vmem:[#allocation2 + $0x8] sm:$0xff]
    %v44 = vld [vmem:[#allocation2 + $0x10] sm:$0x3f]
    %v45 = vld [vmem:[#allocation5] sm:$0xff]
    %v46 = vld [vmem:[#allocation5 + $0x8] sm:$0xff]
    %v47 = vld [vmem:[#allocation5 + $0x10] sm:$0xff]
    %v48 = vld [vmem:[#allocation5 + $0x18] sm:$0xff]
    %v49 = vld [vmem:[#allocation5 + $0x20] sm:$0xff]
    %v50 = vld [vmem:[#allocation5 + $0x28] sm:$0xff]
    %v51 = vld [vmem:[#allocation5 + $0x30] sm:$0xff]
    %v52 = vld [vmem:[#allocation5 + $0x38] sm:$0xff]
    %v53 = vld [vmem:[#allocation5 + $0x40] sm:$0xff]
    %v54 = vld [vmem:[#allocation5 + $0x48] sm:$0xff]
    %v55 = vld [vmem:[#allocation5 + $0x50] sm:$0xff]
    %v56 = vld [vmem:[#allocation5 + $0x58] sm:$0xff]
    %v57 = vld [vmem:[#allocation5 + $0x60] sm:$0xff]
    %v58 = vld [vmem:[#allocation5 + $0x68] sm:$0xff]
    %v59 = vld [vmem:[#allocation5 + $0x70] sm:$0xff]
    %v60 = vld [vmem:[#allocation5 + $0x78] sm:$0xff]
    %v61 = vld [vmem:[#allocation5 + $0x80] sm:$0xff]
    %v62 = vld [vmem:[#allocation5 + $0x88] sm:$0xff]
    %v63 = vld [vmem:[#allocation5 + $0x90] sm:$0xff]
    %v64 = vld [vmem:[#allocation5 + $0x98] sm:$0xff]
    %v65 = vld [vmem:[#allocation5 + $0xa0] sm:$0xff]
    %v66 = vld [vmem:[#allocation5 + $0xa8] sm:$0xff]
    %v67 = vld [vmem:[#allocation5 + $0xb0] sm:$0xff]
    %v68 = vld [vmem:[#allocation5 + $0xb8] sm:$0xff]
    %v69 = vld [vmem:[#allocation5 + $0xc0] sm:$0xff]
    %v70 = vld [vmem:[#allocation5 + $0xc8] sm:$0xff]
    %v71 = vld [vmem:[#allocation5 + $0xd0] sm:$0xff]
    %v72 = vld [vmem:[#allocation5 + $0xd8] sm:$0xff]
    %v73 = vld [vmem:[#allocation5 + $0xe0] sm:$0xff]
    %v74 = vld [vmem:[#allocation5 + $0xe8] sm:$0xff]
    %v75 = vld [vmem:[#allocation5 + $0xf0] sm:$0xff]
    %v76 = vld [vmem:[#allocation5 + $0xf8] sm:$0xff]
    %v77 = vld [vmem:[#allocation5 + $0x100] sm:$0xff]
    %v78 = vld [vmem:[#allocation5 + $0x108] sm:$0xff]
    %v79 = vld [vmem:[#allocation5 + $0x110] sm:$0xff]
    %v80 = vld [vmem:[#allocation5 + $0x118] sm:$0xff]
    %v81 = vld [vmem:[#allocation5 + $0x120] sm:$0xff]
    %v82 = vld [vmem:[#allocation5 + $0x128] sm:$0xff]
    %v83 = vld [vmem:[#allocation5 + $0x130] sm:$0xff]
    %v84 = vld [vmem:[#allocation5 + $0x138] sm:$0xff]
    %v85 = vld [vmem:[#allocation5 + $0x140] sm:$0xff]
    %v86 = vld [vmem:[#allocation5 + $0x148] sm:$0xff]
    %v87 = vld [vmem:[#allocation5 + $0x150] sm:$0xff]
    %v88 = vld [vmem:[#allocation5 + $0x158] sm:$0xff]
    %v89 = vld [vmem:[#allocation5 + $0x160] sm:$0xff]
    %v90 = vld [vmem:[#allocation5 + $0x168] sm:$0xff]
    %v91 = vld [vmem:[#allocation5 + $0x170] sm:$0xff]
    %v92 = vld [vmem:[#allocation5 + $0x178] sm:$0xff]
    %v93 = vld [vmem:[#allocation5 + $0x180] sm:$0xff]
    %v94 = vld [vmem:[#allocation5 + $0x188] sm:$0xff]
    %v95 = vld [vmem:[#allocation5 + $0x190] sm:$0xff]
    %v96 = vld [vmem:[#allocation5 + $0x198] sm:$0xff]
    %v97 = vld [vmem:[#allocation5 + $0x1a0] sm:$0xff]
    %v98 = vld [vmem:[#allocation5 + $0x1a8] sm:$0xff]
    %v99 = vld [vmem:[#allocation5 + $0x1b0] sm:$0xff]
    %v100 = vld [vmem:[#allocation5 + $0x1b8] sm:$0xff]
    %v101 = vld [vmem:[#allocation5 + $0x1c0] sm:$0xff]
    %v102 = vld [vmem:[#allocation5 + $0x1c8] sm:$0xff]
    %v103 = vld [vmem:[#allocation5 + $0x1d0] sm:$0xff]
    %v104 = vld [vmem:[#allocation5 + $0x1d8] sm:$0xff]
    %v105 = vld [vmem:[#allocation5 + $0x1e0] sm:$0xff]
    %v106 = vld [vmem:[#allocation5 + $0x1e8] sm:$0xff]
    %v107 = vld [vmem:[#allocation5 + $0x1f0] sm:$0xff]
    %v108 = vld [vmem:[#allocation5 + $0x1f8] sm:$0xff]
    %v109 = vld [vmem:[#allocation5 + $0x200] sm:$0xff]
    %v110 = vld [vmem:[#allocation5 + $0x208] sm:$0xff]
    %v111 = vld [vmem:[#allocation5 + $0x210] sm:$0xff]
    %v112 = vld [vmem:[#allocation5 + $0x218] sm:$0xff]
    %v113 = vld [vmem:[#allocation5 + $0x220] sm:$0xff]
    %v114 = vld [vmem:[#allocation5 + $0x228] sm:$0xff]
    %v115 = vld [vmem:[#allocation5 + $0x230] sm:$0xff]
    %v116 = vld [vmem:[#allocation5 + $0x238] sm:$0xff]
    %v117 = vld [vmem:[#allocation5 + $0x240] sm:$0xff]
    %v118 = vld [vmem:[#allocation5 + $0x248] sm:$0xff]
    %v119 = vld [vmem:[#allocation5 + $0x250] sm:$0xff]
    %v120 = vld [vmem:[#allocation5 + $0x258] sm:$0xff]
    %v121 = vld [vmem:[#allocation5 + $0x260] sm:$0xff]
    %v122 = vld [vmem:[#allocation5 + $0x268] sm:$0xff]
    %v123 = vld [vmem:[#allocation5 + $0x270] sm:$0xff]
    %v124 = vld [vmem:[#allocation5 + $0x278] sm:$0xff]
    %v125 = vld [vmem:[#allocation5 + $0x280] sm:$0xff]
    %v126 = vld [vmem:[#allocation5 + $0x288] sm:$0xff]
    %v127 = vld [vmem:[#allocation5 + $0x290] sm:$0xff]
    %v128 = vld [vmem:[#allocation5 + $0x298] sm:$0xff]
    %v129 = vld [vmem:[#allocation5 + $0x2a0] sm:$0xff]
    %v130 = vld [vmem:[#allocation5 + $0x2a8] sm:$0xff]
    %v131 = vld [vmem:[#allocation5 + $0x2b0] sm:$0xff]
    %v132 = vld [vmem:[#allocation5 + $0x2b8] sm:$0xff]
    %v133 = vld [vmem:[#allocation5 + $0x2c0] sm:$0xff]
    %v134 = vld [vmem:[#allocation5 + $0x2c8] sm:$0xff]
    %v135 = vld [vmem:[#allocation5 + $0x2d0] sm:$0xff]
    %v136 = vld [vmem:[#allocation5 + $0x2d8] sm:$0xff]
    %v137 = vld [vmem:[#allocation5 + $0x2e0] sm:$0xff]
    %v138 = vld [vmem:[#allocation5 + $0x2e8] sm:$0xff]
    %v139 = vld [vmem:[#allocation5 + $0x2f0] sm:$0xff]
    %v140 = vld [vmem:[#allocation5 + $0x2f8] sm:$0xff]
    %v141 = vld [vmem:[#allocation5 + $0x300] sm:$0xff]
    %v142 = vld [vmem:[#allocation5 + $0x308] sm:$0xff]
    %v143 = vld [vmem:[#allocation5 + $0x310] sm:$0xff]
    %v144 = vld [vmem:[#allocation5 + $0x318] sm:$0xff]
    %v145 = vld [vmem:[#allocation5 + $0x320] sm:$0xff]
    %v146 = vld [vmem:[#allocation5 + $0x328] sm:$0xff]
    %v147 = vld [vmem:[#allocation5 + $0x330] sm:$0xff]
    %v148 = vld [vmem:[#allocation5 + $0x338] sm:$0xff]
    %v149 = vld [vmem:[#allocation5 + $0x340] sm:$0xff]
    %v150 = vld [vmem:[#allocation5 + $0x348] sm:$0xff]
    %v151 = vld [vmem:[#allocation5 + $0x350] sm:$0xff]
    %v152 = vld [vmem:[#allocation5 + $0x358] sm:$0xff]
    %v153 = vld [vmem:[#allocation5 + $0x360] sm:$0xff]
    %v154 = vld [vmem:[#allocation5 + $0x368] sm:$0xff]
    %v155 = vld [vmem:[#allocation5 + $0x370] sm:$0xff]
    %v156 = vld [vmem:[#allocation5 + $0x378] sm:$0xff]
    %v157 = vld [vmem:[#allocation5 + $0x380] sm:$0xff]
    %v158 = vld [vmem:[#allocation5 + $0x388] sm:$0xff]
    %v159 = vld [vmem:[#allocation5 + $0x390] sm:$0xff]
    %v160 = vld [vmem:[#allocation5 + $0x398] sm:$0xff]
    %v161 = vld [vmem:[#allocation5 + $0x3a0] sm:$0xff]
    %v162 = vld [vmem:[#allocation5 + $0x3a8] sm:$0xff]
    %v163 = vld [vmem:[#allocation5 + $0x3b0] sm:$0xff]
    %v164 = vld [vmem:[#allocation5 + $0x3b8] sm:$0xff]
    %v165 = vld [vmem:[#allocation5 + $0x3c0] sm:$0xff]
    %v166 = vld [vmem:[#allocation5 + $0x3c8] sm:$0xff]
    %v167 = vld [vmem:[#allocation5 + $0x3d0] sm:$0xff]
    %v168 = vld [vmem:[#allocation5 + $0x3d8] sm:$0xff]
    %v169 = vld [vmem:[#allocation5 + $0x3e0] sm:$0xff]
    %v170 = vld [vmem:[#allocation5 + $0x3e8] sm:$0xff]
    %v171 = vld [vmem:[#allocation5 + $0x3f0] sm:$0xff]
    %v172 = vld [vmem:[#allocation5 + $0x3f8] sm:$0xff]
    %v173 = vld [vmem:[#allocation5 + $0x400] sm:$0xff]
    %v174 = vld [vmem:[#allocation5 + $0x408] sm:$0xff]
    %v175 = vld [vmem:[#allocation5 + $0x410] sm:$0xff]
    %v176 = vld [vmem:[#allocation5 + $0x418] sm:$0xff]
    %v177 = vld [vmem:[#allocation5 + $0x420] sm:$0xff]
    %v178 = vld [vmem:[#allocation5 + $0x428] sm:$0xff]
    %v179 = vld [vmem:[#allocation5 + $0x430] sm:$0xff]
    %v180 = vld [vmem:[#allocation5 + $0x438] sm:$0xff]
    %v181 = vld [vmem:[#allocation5 + $0x440] sm:$0xff]
    %v182 = vld [vmem:[#allocation5 + $0x448] sm:$0xff]
    %v183 = vld [vmem:[#allocation5 + $0x450] sm:$0xff]
    %v184 = vld [vmem:[#allocation5 + $0x458] sm:$0xff]
    %v185 = vld [vmem:[#allocation5 + $0x460] sm:$0xff]
    %v186 = vld [vmem:[#allocation5 + $0x468] sm:$0xff]
    %v187 = vld [vmem:[#allocation5 + $0x470] sm:$0xff]
    %v188 = vld [vmem:[#allocation5 + $0x478] sm:$0xff]
    %v189 = vld [vmem:[#allocation5 + $0x480] sm:$0xff]
    %v190 = vld [vmem:[#allocation5 + $0x488] sm:$0xff]
    %v191 = vld [vmem:[#allocation5 + $0x490] sm:$0xff]
    %v192 = vld [vmem:[#allocation5 + $0x498] sm:$0xff]
    %v193 = vld [vmem:[#allocation5 + $0x4a0] sm:$0xff]
    %v194 = vld [vmem:[#allocation5 + $0x4a8] sm:$0xff]
    %v195 = vld [vmem:[#allocation5 + $0x4b0] sm:$0xff]
    %v196 = vld [vmem:[#allocation5 + $0x4b8] sm:$0xff]
    %v197 = vld [vmem:[#allocation5 + $0x4c0] sm:$0xff]
    %v198 = vld [vmem:[#allocation5 + $0x4c8] sm:$0xff]
    %v199 = vld [vmem:[#allocation5 + $0x4d0] sm:$0xff]
    %v200 = vld [vmem:[#allocation5 + $0x4d8] sm:$0xff]
    %v201 = vld [vmem:[#allocation5 + $0x4e0] sm:$0xff]
    %v202 = vld [vmem:[#allocation5 + $0x4e8] sm:$0xff]
    %v203 = vld [vmem:[#allocation5 + $0x4f0] sm:$0xff]
    %v204 = vld [vmem:[#allocation5 + $0x4f8] sm:$0xff]
    %v205 = vld [vmem:[#allocation5 + $0x500] sm:$0xff]
    %v206 = vld [vmem:[#allocation5 + $0x508] sm:$0xff]
    %210 = vst [vmem:[#allocation1] ss:$4 sm:$0xff] %v42
    %s211 = scalar_lea.vmem [#allocation1], 32
    %212 = vst [vmem:[%s211] ss:$4 sm:$0xff] %v43
    %v213 = vld.sshfl [vmem:[#allocation1] sm:$0xff pattern:$0x73625140]
    %v214 = vld.sshfl [vmem:[#allocation1 + $0x8] sm:$0xff pattern:$0x73625140]
    %v215 = vld.sshfl [vmem:[#allocation1 + $0x10] sm:$0xff pattern:$0x73625140]
    %v216 = vld.sshfl [vmem:[#allocation1 + $0x18] sm:$0xff pattern:$0x73625140]
    %v217 = vld.sshfl [vmem:[#allocation1 + $0x20] sm:$0xff pattern:$0x73625140]
    %v218 = vld.sshfl [vmem:[#allocation1 + $0x28] sm:$0xff pattern:$0x73625140]
    %v219 = vld.sshfl [vmem:[#allocation1 + $0x30] sm:$0xff pattern:$0x73625140]
    %v220 = vld.sshfl [vmem:[#allocation1 + $0x38] sm:$0xff pattern:$0x73625140]
    %221 = vst [vmem:[#allocation1] ss:$4 sm:$0xff] %v44
    %v222 = vld.sshfl [vmem:[#allocation1] sm:$0xff pattern:$0x73625140]
    %v223 = vld.sshfl [vmem:[#allocation1 + $0x8] sm:$0xff pattern:$0x73625140]
    %v224 = vld.sshfl [vmem:[#allocation1 + $0x10] sm:$0xff pattern:$0x73625140]
    %vm235 = vcmask 130048
    %v236 = vsel %vm235, %v224, 0
    %238 = vmatpush.msra.mxu0 %v60
    %239 = vmatpush.msra.mxu0 %v59
    %240 = vmatpush.msra.mxu0 %v58
    %241 = vmatpush.msra.mxu0 %v57
    %242 = vmatpush.msra.mxu0 %v56
    %243 = vmatpush.msra.mxu0 %v55
    %244 = vmatpush.msra.mxu0 %v54
    %245 = vmatpush.msra.mxu0 %v53
    %246 = vmatpush.msra.mxu0 %v52
    %247 = vmatpush.msra.mxu0 %v51
    %248 = vmatpush.msra.mxu0 %v50
    %249 = vmatpush.msra.mxu0 %v49
    %250 = vmatpush.msra.mxu0 %v48
    %251 = vmatpush.msra.mxu0 %v47
    %252 = vmatpush.msra.mxu0 %v46
    %253 = vmatpush.msra.mxu0 %v45
    %254 = vmatmul.f32.gmra.mxu0 %v213
    %v255 = vpop.f32.mrf.mxu0
    %v256 = vadd.f32 0.0, %v255
    %257 = vdwg.mxu0
    %258 = vmatpush.msra.mxu0 %v76
    %259 = vmatpush.msra.mxu0 %v75
    %260 = vmatpush.msra.mxu0 %v74
    %261 = vmatpush.msra.mxu0 %v73
    %262 = vmatpush.msra.mxu0 %v72
    %263 = vmatpush.msra.mxu0 %v71
    %264 = vmatpush.msra.mxu0 %v70
    %265 = vmatpush.msra.mxu0 %v69
    %266 = vmatpush.msra.mxu0 %v68
    %267 = vmatpush.msra.mxu0 %v67
    %268 = vmatpush.msra.mxu0 %v66
    %269 = vmatpush.msra.mxu0 %v65
    %270 = vmatpush.msra.mxu0 %v64
    %271 = vmatpush.msra.mxu0 %v63
    %272 = vmatpush.msra.mxu0 %v62
    %273 = vmatpush.msra.mxu0 %v61
    %274 = vmatmul.f32.gmra.mxu0 %v214
    %v275 = vpop.f32.mrf.mxu0
    %v276 = vadd.f32 %v256, %v275
    %277 = vdwg.mxu0
    %278 = vmatpush.msra.mxu0 %v92
    %279 = vmatpush.msra.mxu0 %v91
    %280 = vmatpush.msra.mxu0 %v90
    %281 = vmatpush.msra.mxu0 %v89
    %282 = vmatpush.msra.mxu0 %v88
    %283 = vmatpush.msra.mxu0 %v87
    %284 = vmatpush.msra.mxu0 %v86
    %285 = vmatpush.msra.mxu0 %v85
    %286 = vmatpush.msra.mxu0 %v84
    %287 = vmatpush.msra.mxu0 %v83
    %288 = vmatpush.msra.mxu0 %v82
    %289 = vmatpush.msra.mxu0 %v81
    %290 = vmatpush.msra.mxu0 %v80
    %291 = vmatpush.msra.mxu0 %v79
    %292 = vmatpush.msra.mxu0 %v78
    %293 = vmatpush.msra.mxu0 %v77
    %294 = vmatmul.f32.gmra.mxu0 %v215
    %v295 = vpop.f32.mrf.mxu0
    %v296 = vadd.f32 %v276, %v295
    %297 = vdwg.mxu0
    %298 = vmatpush.msra.mxu0 %v108
    %299 = vmatpush.msra.mxu0 %v107
    %300 = vmatpush.msra.mxu0 %v106
    %301 = vmatpush.msra.mxu0 %v105
    %302 = vmatpush.msra.mxu0 %v104
    %303 = vmatpush.msra.mxu0 %v103
    %304 = vmatpush.msra.mxu0 %v102
    %305 = vmatpush.msra.mxu0 %v101
    %306 = vmatpush.msra.mxu0 %v100
    %307 = vmatpush.msra.mxu0 %v99
    %308 = vmatpush.msra.mxu0 %v98
    %309 = vmatpush.msra.mxu0 %v97
    %310 = vmatpush.msra.mxu0 %v96
    %311 = vmatpush.msra.mxu0 %v95
    %312 = vmatpush.msra.mxu0 %v94
    %313 = vmatpush.msra.mxu0 %v93
    %314 = vmatmul.f32.gmra.mxu0 %v216
    %v315 = vpop.f32.mrf.mxu0
    %v316 = vadd.f32 %v296, %v315
    %317 = vdwg.mxu0
    %318 = vmatpush.msra.mxu0 %v124
    %319 = vmatpush.msra.mxu0 %v123
    %320 = vmatpush.msra.mxu0 %v122
    %321 = vmatpush.msra.mxu0 %v121
    %322 = vmatpush.msra.mxu0 %v120
    %323 = vmatpush.msra.mxu0 %v119
    %324 = vmatpush.msra.mxu0 %v118
    %325 = vmatpush.msra.mxu0 %v117
    %326 = vmatpush.msra.mxu0 %v116
    %327 = vmatpush.msra.mxu0 %v115
    %328 = vmatpush.msra.mxu0 %v114
    %329 = vmatpush.msra.mxu0 %v113
    %330 = vmatpush.msra.mxu0 %v112
    %331 = vmatpush.msra.mxu0 %v111
    %332 = vmatpush.msra.mxu0 %v110
    %333 = vmatpush.msra.mxu0 %v109
    %334 = vmatmul.f32.gmra.mxu0 %v217
    %v335 = vpop.f32.mrf.mxu0
    %v336 = vadd.f32 %v316, %v335
    %337 = vdwg.mxu0
    %338 = vmatpush.msra.mxu0 %v140
    %339 = vmatpush.msra.mxu0 %v139
    %340 = vmatpush.msra.mxu0 %v138
    %341 = vmatpush.msra.mxu0 %v137
    %342 = vmatpush.msra.mxu0 %v136
    %343 = vmatpush.msra.mxu0 %v135
    %344 = vmatpush.msra.mxu0 %v134
    %345 = vmatpush.msra.mxu0 %v133
    %346 = vmatpush.msra.mxu0 %v132
    %347 = vmatpush.msra.mxu0 %v131
    %348 = vmatpush.msra.mxu0 %v130
    %349 = vmatpush.msra.mxu0 %v129
    %350 = vmatpush.msra.mxu0 %v128
    %351 = vmatpush.msra.mxu0 %v127
    %352 = vmatpush.msra.mxu0 %v126
    %353 = vmatpush.msra.mxu0 %v125
    %354 = vmatmul.f32.gmra.mxu0 %v218
    %v355 = vpop.f32.mrf.mxu0
    %v356 = vadd.f32 %v336, %v355
    %357 = vdwg.mxu0
    %358 = vmatpush.msra.mxu0 %v156
    %359 = vmatpush.msra.mxu0 %v155
    %360 = vmatpush.msra.mxu0 %v154
    %361 = vmatpush.msra.mxu0 %v153
    %362 = vmatpush.msra.mxu0 %v152
    %363 = vmatpush.msra.mxu0 %v151
    %364 = vmatpush.msra.mxu0 %v150
    %365 = vmatpush.msra.mxu0 %v149
    %366 = vmatpush.msra.mxu0 %v148
    %367 = vmatpush.msra.mxu0 %v147
    %368 = vmatpush.msra.mxu0 %v146
    %369 = vmatpush.msra.mxu0 %v145
    %370 = vmatpush.msra.mxu0 %v144
    %371 = vmatpush.msra.mxu0 %v143
    %372 = vmatpush.msra.mxu0 %v142
    %373 = vmatpush.msra.mxu0 %v141
    %374 = vmatmul.f32.gmra.mxu0 %v219
    %v375 = vpop.f32.mrf.mxu0
    %v376 = vadd.f32 %v356, %v375
    %377 = vdwg.mxu0
    %378 = vmatpush.msra.mxu0 %v172
    %379 = vmatpush.msra.mxu0 %v171
    %380 = vmatpush.msra.mxu0 %v170
    %381 = vmatpush.msra.mxu0 %v169
    %382 = vmatpush.msra.mxu0 %v168
    %383 = vmatpush.msra.mxu0 %v167
    %384 = vmatpush.msra.mxu0 %v166
    %385 = vmatpush.msra.mxu0 %v165
    %386 = vmatpush.msra.mxu0 %v164
    %387 = vmatpush.msra.mxu0 %v163
    %388 = vmatpush.msra.mxu0 %v162
    %389 = vmatpush.msra.mxu0 %v161
    %390 = vmatpush.msra.mxu0 %v160
    %391 = vmatpush.msra.mxu0 %v159
    %392 = vmatpush.msra.mxu0 %v158
    %393 = vmatpush.msra.mxu0 %v157
    %394 = vmatmul.f32.gmra.mxu0 %v220
    %v395 = vpop.f32.mrf.mxu0
    %v396 = vadd.f32 %v376, %v395
    %397 = vdwg.mxu0
    %398 = vmatpush.msra.mxu0 %v188
    %399 = vmatpush.msra.mxu0 %v187
    %400 = vmatpush.msra.mxu0 %v186
    %401 = vmatpush.msra.mxu0 %v185
    %402 = vmatpush.msra.mxu0 %v184
    %403 = vmatpush.msra.mxu0 %v183
    %404 = vmatpush.msra.mxu0 %v182
    %405 = vmatpush.msra.mxu0 %v181
    %406 = vmatpush.msra.mxu0 %v180
    %407 = vmatpush.msra.mxu0 %v179
    %408 = vmatpush.msra.mxu0 %v178
    %409 = vmatpush.msra.mxu0 %v177
    %410 = vmatpush.msra.mxu0 %v176
    %411 = vmatpush.msra.mxu0 %v175
    %412 = vmatpush.msra.mxu0 %v174
    %413 = vmatpush.msra.mxu0 %v173
    %414 = vmatmul.f32.gmra.mxu0 %v222
    %v415 = vpop.f32.mrf.mxu0
    %v416 = vadd.f32 %v396, %v415
    %417 = vdwg.mxu0
    %418 = vmatpush.msra.mxu0 %v204
    %419 = vmatpush.msra.mxu0 %v203
    %420 = vmatpush.msra.mxu0 %v202
    %421 = vmatpush.msra.mxu0 %v201
    %422 = vmatpush.msra.mxu0 %v200
    %423 = vmatpush.msra.mxu0 %v199
    %424 = vmatpush.msra.mxu0 %v198
    %425 = vmatpush.msra.mxu0 %v197
    %426 = vmatpush.msra.mxu0 %v196
    %427 = vmatpush.msra.mxu0 %v195
    %428 = vmatpush.msra.mxu0 %v194
    %429 = vmatpush.msra.mxu0 %v193
    %430 = vmatpush.msra.mxu0 %v192
    %431 = vmatpush.msra.mxu0 %v191
    %432 = vmatpush.msra.mxu0 %v190
    %433 = vmatpush.msra.mxu0 %v189
    %434 = vmatmul.f32.gmra.mxu0 %v223
    %v435 = vpop.f32.mrf.mxu0
    %v436 = vadd.f32 %v416, %v435
    %437 = vdwg.mxu0
    %438 = vmatpush.msra.mxu0 0.0
    %439 = vmatpush.msra.mxu0 0.0
    %440 = vmatpush.msra.mxu0 0.0
    %441 = vmatpush.msra.mxu0 0.0
    %442 = vmatpush.msra.mxu0 0.0
    %443 = vmatpush.msra.mxu0 0.0
    %444 = vmatpush.msra.mxu0 0.0
    %445 = vmatpush.msra.mxu0 0.0
    %446 = vmatpush.msra.mxu0 0.0
    %447 = vmatpush.msra.mxu0 0.0
    %448 = vmatpush.msra.mxu0 0.0
    %449 = vmatpush.msra.mxu0 0.0
    %450 = vmatpush.msra.mxu0 0.0
    %451 = vmatpush.msra.mxu0 0.0
    %452 = vmatpush.msra.mxu0 %v206
    %453 = vmatpush.msra.mxu0 %v205
    %454 = vmatmul.f32.gmra.mxu0 %v236
    %v455 = vpop.f32.mrf.mxu0
    %v456 = vadd.f32 %v436, %v455
    %457 = vdwg.mxu0
    %458 = vst [vmem:[#allocation7] sm:$0x3] %v456
    // Predicated region
    $region18: #{tpu_custom_call.1} parent=1 // pred_check
      _
    $region19: #{tpu_custom_call.1} parent=1 // pred_check_branch
      %460 = sbr.rel (0) target = $region21
    $region20: #{tpu_custom_call.1} parent=1 // pred_region
      %462 = vsyncadd [#allocation4], 0
      %s464 = sshll.u32 [#allocation7], 4
      %s465 = int_to_ptr.vmem [resolvable:$true] %s464
      %s466 = sshll.u32 %s2, 4
      %s467 = int_to_ptr.hbm [resolvable:$true] %s466
      %469 = dma.vmem_to_hbm [thread:$0]  %s465, 32, %s467, [#allocation4]
    $region21: #{tpu_custom_call.1} parent=1 // pred_fallthru
      _
    // Predicated region
    $region22: #{tpu_custom_call.1} parent=1 // pred_check
      _
    $region23: #{tpu_custom_call.1} parent=1 // pred_check_branch
      %471 = sbr.rel (0) target = $region25
    $region24: #{tpu_custom_call.1} parent=1 // pred_region
      %473 = dma.done [#allocation4], 32
    $region25: #{tpu_custom_call.1} parent=1 // pred_fallthru
      _
    %474 = vsyncpa [#allocation3], 1
    %475 = vsyncpa [#allocation6], 1
    %476 = vsyncpa [#allocation4], 1

</llo_original>
